<compile_context>
chip_gen: v7x
topology: tpu7x:2x2x1
jax: 0.10.0
libtpu: 0.0.40
codegen_flags: <defaults>
</compile_context>

<pallas_src>
import functools

import jax
import jax.numpy as jnp
from jax import lax
from jax.experimental import pallas as pl
from jax.experimental.pallas import tpu as pltpu


_FUSED_OUT_BLOCK_BYTES = 2 * 1024 * 1024   # fused-path output slab target


# --------------------------- hardware params --------------------------------


@functools.lru_cache(maxsize=None)
def _hw_params():
    """(vmem_limit_bytes, block_bytes, fused_max_bytes), generation-aware."""
    vmem_phys = None
    try:
        info = pltpu.get_tpu_info()
        vmem_phys = int(getattr(info, "vmem_capacity_bytes", 0)) or None
    except Exception:
        vmem_phys = None
    if vmem_phys is None:
        vmem_phys = 64 * 1024 * 1024            # unknown -> assume smallest (v7x)
    if vmem_phys <= 64 * 1024 * 1024:           # v7x-class: 64 MiB physical
        vmem_limit = 48 * 1024 * 1024
    else:                                       # v5e / v6e: 128 MiB physical
        vmem_limit = 96 * 1024 * 1024
    block_bytes = 4 * 1024 * 1024               # big blocks amortize step overhead
    fused_max = vmem_limit // 4                 # resident input (x2 headroom) + out blocks
    return vmem_limit, block_bytes, fused_max


# ----------------------------- kernels --------------------------------------


def _stats_kernel(x_ref, stat_ref):
    """Per-channel partial sum / sum-of-squares of one (mb, C, lb) block.

    Output is a single lane-dense (1, 1, 2, C) block: row 0 = sum, row 1 = sumsq.
    """
    x = x_ref[...].astype(jnp.float32)                 # (mb, C, lb)
    xs = jnp.sum(jnp.sum(x, axis=0), axis=-1)          # (C,)
    xq = jnp.sum(jnp.sum(x * x, axis=0), axis=-1)      # (C,)
    stat_ref[...] = jnp.stack([xs, xq], axis=0)[None, None]   # (1, 1, 2, C)


def _norm_kernel(x_ref, scale_ref, shift_ref, o_ref):
    """out = x * scale[c] + shift[c]; scale/shift are (C, 1), lane-broadcast."""
    x = x_ref[...].astype(jnp.float32)                 # (mb, C, lb)
    y = x * scale_ref[...][None] + shift_ref[...][None]
    o_ref[...] = y.astype(o_ref.dtype)


def _fused_kernel(x_ref, w_ref, b_ref, o_ref, scale_ref, shift_ref,
                  *, eps, inv_n, mb, gm):
    """Whole tensor resident in VMEM (constant-index input block).

    Step 0 computes per-channel mean/var (true two-pass, block-wise to bound
    temporaries) into VMEM scratch; every step normalizes one (mb, C, L) output
    slab so writeback overlaps subsequent compute.
    """
    i = pl.program_id(0)
    c = scale_ref.shape[0]

    @pl.when(i == 0)
    def _():
        zeros = jnp.zeros((c, 1), jnp.float32)

        def mean_body(s, acc):
            r = pl.multiple_of(s * mb, mb)
            blk = x_ref[pl.ds(r, mb), :, :].astype(jnp.float32)    # (mb, C, L)
            return acc + jnp.sum(jnp.sum(blk, axis=0), axis=-1, keepdims=True)

        mean = lax.fori_loop(0, gm, mean_body, zeros) * inv_n       # (C, 1)

        def var_body(s, acc):
            r = pl.multiple_of(s * mb, mb)
            blk = x_ref[pl.ds(r, mb), :, :].astype(jnp.float32)
            d = blk - mean[None]
            return acc + jnp.sum(jnp.sum(d * d, axis=0), axis=-1, keepdims=True)

        var = lax.fori_loop(0, gm, var_body, zeros) * inv_n         # (C, 1), >= 0
        inv_std = lax.rsqrt(var + eps)
        scale = w_ref[...] * inv_std
        scale_ref[...] = scale
        shift_ref[...] = b_ref[...] - mean * scale

    r = pl.multiple_of(i * mb, mb)
    xb = x_ref[pl.ds(r, mb), :, :].astype(jnp.float32)              # (mb, C, L)
    o_ref[...] = (xb * scale_ref[...][None] + shift_ref[...][None]).astype(o_ref.dtype)


# --------------------------- tile selection ----------------------------------


def _round_up(n, m):
    return ((n + m - 1) // m) * m


def _sublane_pack(itemsize):
    # f32 -> 8 sublanes, bf16 -> 16, int8 -> 32
    return max(8, 32 // max(1, itemsize))


def _padded_row_bytes(C, L, itemsize):
    """VMEM bytes of one (1, C, L) row after (sublane, lane) padding."""
    return _round_up(C, _sublane_pack(itemsize)) * _round_up(L, 128) * itemsize


def _largest_divisor_at_most(n, cap):
    cap = int(max(1, min(n, cap)))
    for d in range(cap, 0, -1):
        if n % d == 0:
            return d
    return 1


def _pick_m_tile(M, cap, prefer_even_grid=True):
    """Largest divisor of M <= cap, preferring an even grid (v7x megacore)."""
    cap = int(max(1, min(M, cap)))
    divs = [d for d in range(1, cap + 1) if M % d == 0]
    largest = max(divs)
    if prefer_even_grid:
        even = [d for d in divs if (M // d) % 2 == 0]
        if even and 2 * max(even) >= largest:       # don't shrink blocks >2x
            return max(even)
    return largest


def _choose_tiles(M, C, L, itemsize, block_bytes):
    """Pick (mb, lb) dividing (M, L) so one *padded* input block ~ block_bytes."""
    row = _padded_row_bytes(C, L, itemsize)
    if row <= block_bytes:
        mb = _pick_m_tile(M, block_bytes // row)
        return mb, L
    # A single (1, C, L) row exceeds the budget: tile the lane axis, but only
    # with a multiple-of-128 divisor of L (legal, unmasked stores).  If none
    # exists (e.g. L = 49/196/784/3136), keep lb = L (always legal; a full row
    # is <= a few MiB for every real ResNet stage and fits the VMEM limit).
    col_bytes = _round_up(C, _sublane_pack(itemsize)) * itemsize
    lb = 0
    if L % 128 == 0:
        cap = max(128, (block_bytes // col_bytes) // 128 * 128)
        cand = min(cap, L)
        cand = cand // 128 * 128
        while cand >= 128 and L % cand != 0:
            cand -= 128
        if cand >= 128:
            lb = cand
    if lb == 0:
        lb = L
    return 1, lb


# ------------------------------ forward --------------------------------------


@functools.partial(
    jax.jit,
    static_argnames=("eps", "vmem_limit", "block_bytes", "fused_max"))
def _bn_forward(x, weight, bias, *, eps, vmem_limit, block_bytes, fused_max):
    T, B, C, H, W = x.shape
    M, L = T * B, H * W
    n_red = M * L                                   # reduced elems per channel
    x3 = x.reshape(M, C, L)                         # free reshape, no transpose
    w2 = weight.astype(jnp.float32).reshape(C, 1)
    b2 = bias.astype(jnp.float32).reshape(C, 1)
    itemsize = x.dtype.itemsize
    padded_bytes = M * _padded_row_bytes(C, L, itemsize)

    # ---- fused (2N HBM traffic) path: whole tensor resident in VMEM ---------
    if padded_bytes <= fused_max:
        row_f32 = C * L * 4
        mb = _largest_divisor_at_most(M, max(1, _FUSED_OUT_BLOCK_BYTES // row_f32))
        gm = M // mb
        y3 = pl.pallas_call(
            functools.partial(_fused_kernel, eps=float(eps),
                              inv_n=1.0 / float(n_red), mb=mb, gm=gm),
            out_shape=jax.ShapeDtypeStruct((M, C, L), x.dtype),
            grid_spec=pltpu.PrefetchScalarGridSpec(
                num_scalar_prefetch=0,
                grid=(gm,),
                in_specs=[
                    pl.BlockSpec((M, C, L), lambda i: (0, 0, 0)),   # resident
                    pl.BlockSpec((C, 1), lambda i: (0, 0)),
                    pl.BlockSpec((C, 1), lambda i: (0, 0)),
                ],
                out_specs=pl.BlockSpec((mb, C, L), lambda i: (i, 0, 0)),
                scratch_shapes=[pltpu.VMEM((C, 1), jnp.float32),
                                pltpu.VMEM((C, 1), jnp.float32)],
            ),
            compiler_params=pltpu.CompilerParams(
                dimension_semantics=("arbitrary",),      # step 0 seeds scratch
                vmem_limit_bytes=vmem_limit,
            ),
        )(x3, w2, b2)
        return y3.reshape(T, B, C, H, W)

    # ---- two-pass (3N HBM traffic) path --------------------------------------
    mb, lb = _choose_tiles(M, C, L, itemsize, block_bytes)
    gm, gl = M // mb, L // lb

    # Pass 1: per-grid-step partial sums (one lane-dense (1,1,2,C) block each;
    # no revisited accumulator -> both axes "parallel", v7x megacore friendly).
    part = pl.pallas_call(
        _stats_kernel,
        out_shape=jax.ShapeDtypeStruct((gm, gl, 2, C), jnp.float32),
        grid_spec=pltpu.PrefetchScalarGridSpec(
            num_scalar_prefetch=0,
            grid=(gm, gl),
            in_specs=[pl.BlockSpec((mb, C, lb), lambda i, j: (i, 0, j))],
            out_specs=pl.BlockSpec((1, 1, 2, C), lambda i, j: (i, j, 0, 0)),
        ),
        compiler_params=pltpu.CompilerParams(
            dimension_semantics=("parallel", "parallel"),
            vmem_limit_bytes=vmem_limit,
        ),
    )(x3)

    # Tiny per-channel glue: fold mean/var + affine into scale/shift.
    s = jnp.sum(part[:, :, 0, :], axis=(0, 1))               # (C,)
    sq = jnp.sum(part[:, :, 1, :], axis=(0, 1))              # (C,)
    mean = s / jnp.float32(n_red)
    var = jnp.maximum(sq / jnp.float32(n_red) - mean * mean, 0.0)
    inv_std = lax.rsqrt(var + jnp.float32(eps))
    scale = weight.astype(jnp.float32) * inv_std
    shift = bias.astype(jnp.float32) - mean * scale

    # Pass 2: elementwise normalize + affine.  scale/shift use a constant block
    # index, so they stay resident in VMEM (no per-step re-fetch).
    y3 = pl.pallas_call(
        _norm_kernel,
        out_shape=jax.ShapeDtypeStruct((M, C, L), x.dtype),
        grid_spec=pltpu.PrefetchScalarGridSpec(
            num_scalar_prefetch=0,
            grid=(gm, gl),
            in_specs=[
                pl.BlockSpec((mb, C, lb), lambda i, j: (i, 0, j)),
                pl.BlockSpec((C, 1), lambda i, j: (0, 0)),
                pl.BlockSpec((C, 1), lambda i, j: (0, 0)),
            ],
            out_specs=pl.BlockSpec((mb, C, lb), lambda i, j: (i, 0, j)),
        ),
        compiler_params=pltpu.CompilerParams(
            dimension_semantics=("parallel", "parallel"),
            vmem_limit_bytes=vmem_limit,
        ),
    )(x3, scale.reshape(C, 1), shift.reshape(C, 1))

    return y3.reshape(T, B, C, H, W)


def batch_norm_2d_forward(x, weight, bias, *, eps=1e-5,
                          block_bytes=None, fused_max_bytes=None):
    """Training-mode TDBN forward: per-channel BN over (T, B, H, W)."""
    vmem_limit, default_block, default_fused = _hw_params()
    bb = default_block if block_bytes is None else int(block_bytes)
    fm = default_fused if fused_max_bytes is None else int(fused_max_bytes)
    return _bn_forward(x, weight, bias, eps=float(eps),
                       vmem_limit=vmem_limit, block_bytes=bb, fused_max=fm)


# ------------------------------ reference ------------------------------------


def _reference(x, weight, bias, eps=1e-5):
    """Pure-jnp reference: channel = dim 2, biased variance, affine."""
    red = (0, 1, 3, 4)
    mean = jnp.mean(x, axis=red, keepdims=True)
    var = jnp.mean((x - mean) ** 2, axis=red, keepdims=True)
    w = weight.reshape(1, 1, -1, 1, 1)
    b = bias.reshape(1, 1, -1, 1, 1)
    return (x - mean) * lax.rsqrt(var + eps) * w + b


if __name__ == "__main__":
    key = jax.random.PRNGKey(0)
    thresh = 0.5  # BatchNorm3d1.reset_parameters(): weight <- thresh, bias <- 0

    # Case 1: tiny tensor -> fused resident-input path (TDBN init params).
    T, B, C, H, W = 2, 2, 4, 16, 16
    k1, k2, k3 = jax.random.split(key, 3)
    x = jax.random.normal(k1, (T, B, C, H, W), dtype=jnp.float32)
    w = jnp.full((C,), thresh, dtype=jnp.float32)
    b = jnp.zeros((C,), dtype=jnp.float32)
    y = jax.block_until_ready(batch_norm_2d_forward(x, w, b))
    y_ref = _reference(x, w, b)
    assert y.shape == x.shape and y.dtype == x.dtype
    assert jnp.allclose(y, y_ref, atol=1e-4, rtol=1e-4)

    # Case 2: larger tensor, nonzero affine params -> fused path with a
    # multi-step output grid (stats under pl.when(i==0) + scratch reuse).
    T, B, C, H, W = 4, 4, 64, 32, 32
    x = jax.random.normal(k2, (T, B, C, H, W), dtype=jnp.float32)
    w = 1.0 + 0.1 * jax.random.normal(k3, (C,), dtype=jnp.float32)
    b = 0.1 * jnp.arange(C, dtype=jnp.float32)
    y = jax.block_until_ready(batch_norm_2d_forward(x, w, b))
    y_ref = _reference(x, w, b)
    assert y.shape == x.shape and y.dtype == x.dtype
    assert jnp.allclose(y, y_ref, atol=1e-4, rtol=1e-4)

    # Case 3: force the two-pass path (row tiling, even grid along M).
    y = jax.block_until_ready(
        batch_norm_2d_forward(x, w, b, fused_max_bytes=0))
    assert jnp.allclose(y, y_ref, atol=1e-4, rtol=1e-4)

    # Case 4: force lane tiling (lb < H*W, lb a multiple of 128) in two-pass.
    y = jax.block_until_ready(
        batch_norm_2d_forward(x, w, b, fused_max_bytes=0,
                              block_bytes=128 * 1024))
    assert jnp.allclose(y, y_ref, atol=1e-4, rtol=1e-4)

    print("KERNEL_OK")
</pallas_src>

<mosaic_0001>
module attributes {stable_mosaic.version = 11 : i64} {
  func.func @_fused_kernel(%arg0: i32, %arg1: memref<4x4x256xf32, #tpu.memory_space<vmem>>, %arg2: memref<4x1xf32, #tpu.memory_space<vmem>>, %arg3: memref<4x1xf32, #tpu.memory_space<vmem>>, %arg4: memref<4x4x256xf32, #tpu.memory_space<vmem>>, %arg5: memref<4x1xf32, #tpu.memory_space<vmem>>, %arg6: memref<4x1xf32, #tpu.memory_space<vmem>>) attributes {dimension_semantics = [#tpu.dimension_semantics<arbitrary>], iteration_bounds = array<i64: 1>, scalar_prefetch = 0 : i64, scratch_operands = 2 : i64, tpu.core_type = #tpu.core_type<tc>, window_params = [{pipeline_mode = #tpu.pipeline_mode<synchronous>, transform_indices = @transform_0, window_bounds = array<i64: 4, 4, 256>}, {pipeline_mode = #tpu.pipeline_mode<synchronous>, transform_indices = @transform_1, window_bounds = array<i64: 4, 1>}, {pipeline_mode = #tpu.pipeline_mode<synchronous>, transform_indices = @transform_2, window_bounds = array<i64: 4, 1>}, {transform_indices = @transform_3, window_bounds = array<i64: 4, 4, 256>}]} {
    %c0_i32 = arith.constant 0 : i32
    %0 = arith.cmpi eq, %arg0, %c0_i32 : i32
    %1 = arith.extui %0 : i1 to i32
    %c0_i32_0 = arith.constant 0 : i32
    %2 = arith.cmpi ne, %1, %c0_i32_0 : i32
    scf.if %2 {
      %cst = arith.constant 0.000000e+00 : f32
      %16 = vector.broadcast %cst : f32 to vector<4x1xf32>
      %c0_i32_9 = arith.constant 0 : i32
      %c4_i32_10 = arith.constant 4 : i32
      %17 = arith.muli %c0_i32_9, %c4_i32_10 : i32
      %18 = tpu.assume_multiple %17, 4 : i32
      %19 = arith.index_cast %18 : i32 to index
      %c0_11 = arith.constant 0 : index
      %c0_12 = arith.constant 0 : index
      %20 = vector.load %arg1[%19, %c0_11, %c0_12] : memref<4x4x256xf32, #tpu.memory_space<vmem>>, vector<4x4x256xf32>
      %cst_13 = arith.constant dense<0.000000e+00> : vector<4x256xf32>
      %21 = vector.multi_reduction <add>, %20, %cst_13 [0] : vector<4x4x256xf32> to vector<4x256xf32>
      %cst_14 = arith.constant dense<0.000000e+00> : vector<4xf32>
      %22 = vector.multi_reduction <add>, %21, %cst_14 [1] : vector<4x256xf32> to vector<4xf32>
      %23 = vector.shape_cast %22 : vector<4xf32> to vector<4x1xf32>
      %24 = arith.addf %16, %23 : vector<4x1xf32>
      %c1_i32 = arith.constant 1 : i32
      %cst_15 = arith.constant 9.765625E-4 : f32
      %25 = vector.broadcast %cst_15 : f32 to vector<4x1xf32>
      %26 = arith.mulf %24, %25 : vector<4x1xf32>
      %c0_i32_16 = arith.constant 0 : i32
      %c4_i32_17 = arith.constant 4 : i32
      %27 = arith.muli %c0_i32_16, %c4_i32_17 : i32
      %28 = tpu.assume_multiple %27, 4 : i32
      %29 = arith.index_cast %28 : i32 to index
      %c0_18 = arith.constant 0 : index
      %c0_19 = arith.constant 0 : index
      %30 = vector.load %arg1[%29, %c0_18, %c0_19] : memref<4x4x256xf32, #tpu.memory_space<vmem>>, vector<4x4x256xf32>
      %31 = vector.shape_cast %26 : vector<4x1xf32> to vector<1x4x1xf32>
      %32 = vector.broadcast %31 : vector<1x4x1xf32> to vector<4x4x256xf32>
      %33 = arith.subf %30, %32 : vector<4x4x256xf32>
      %34 = arith.mulf %33, %33 : vector<4x4x256xf32>
      %cst_20 = arith.constant dense<0.000000e+00> : vector<4x256xf32>
      %35 = vector.multi_reduction <add>, %34, %cst_20 [0] : vector<4x4x256xf32> to vector<4x256xf32>
      %cst_21 = arith.constant dense<0.000000e+00> : vector<4xf32>
      %36 = vector.multi_reduction <add>, %35, %cst_21 [1] : vector<4x256xf32> to vector<4xf32>
      %37 = vector.shape_cast %36 : vector<4xf32> to vector<4x1xf32>
      %38 = arith.addf %16, %37 : vector<4x1xf32>
      %c1_i32_22 = arith.constant 1 : i32
      %cst_23 = arith.constant 9.765625E-4 : f32
      %39 = vector.broadcast %cst_23 : f32 to vector<4x1xf32>
      %40 = arith.mulf %38, %39 : vector<4x1xf32>
      %cst_24 = arith.constant 9.99999974E-6 : f32
      %41 = vector.broadcast %cst_24 : f32 to vector<4x1xf32>
      %42 = arith.addf %40, %41 : vector<4x1xf32>
      %43 = math.rsqrt %42 : vector<4x1xf32>
      %c0_25 = arith.constant 0 : index
      %c0_26 = arith.constant 0 : index
      %44 = vector.load %arg2[%c0_25, %c0_26] : memref<4x1xf32, #tpu.memory_space<vmem>>, vector<4x1xf32>
      %45 = arith.mulf %44, %43 : vector<4x1xf32>
      %c0_27 = arith.constant 0 : index
      %c0_28 = arith.constant 0 : index
      %46 = vector.load %arg5[%c0_27, %c0_28] : memref<4x1xf32, #tpu.memory_space<vmem>>, vector<4x1xf32>
      tpu.vector_store %arg5[%c0_27, %c0_28], %45 {strides = array<i32>} : memref<4x1xf32, #tpu.memory_space<vmem>>, vector<4x1xf32>,
      %c0_29 = arith.constant 0 : index
      %c0_30 = arith.constant 0 : index
      %47 = vector.load %arg3[%c0_29, %c0_30] : memref<4x1xf32, #tpu.memory_space<vmem>>, vector<4x1xf32>
      %48 = arith.mulf %26, %45 : vector<4x1xf32>
      %49 = arith.subf %47, %48 : vector<4x1xf32>
      %c0_31 = arith.constant 0 : index
      %c0_32 = arith.constant 0 : index
      %50 = vector.load %arg6[%c0_31, %c0_32] : memref<4x1xf32, #tpu.memory_space<vmem>>, vector<4x1xf32>
      tpu.vector_store %arg6[%c0_31, %c0_32], %49 {strides = array<i32>} : memref<4x1xf32, #tpu.memory_space<vmem>>, vector<4x1xf32>,
    } else {
    }
    %c4_i32 = arith.constant 4 : i32
    %3 = arith.muli %arg0, %c4_i32 : i32
    %4 = tpu.assume_multiple %3, 4 : i32
    %5 = arith.index_cast %4 : i32 to index
    %c0 = arith.constant 0 : index
    %c0_1 = arith.constant 0 : index
    %6 = vector.load %arg1[%5, %c0, %c0_1] : memref<4x4x256xf32, #tpu.memory_space<vmem>>, vector<4x4x256xf32>
    %c0_2 = arith.constant 0 : index
    %c0_3 = arith.constant 0 : index
    %7 = vector.load %arg5[%c0_2, %c0_3] : memref<4x1xf32, #tpu.memory_space<vmem>>, vector<4x1xf32>
    %8 = vector.shape_cast %7 : vector<4x1xf32> to vector<1x4x1xf32>
    %9 = vector.broadcast %8 : vector<1x4x1xf32> to vector<4x4x256xf32>
    %10 = arith.mulf %6, %9 : vector<4x4x256xf32>
    %c0_4 = arith.constant 0 : index
    %c0_5 = arith.constant 0 : index
    %11 = vector.load %arg6[%c0_4, %c0_5] : memref<4x1xf32, #tpu.memory_space<vmem>>, vector<4x1xf32>
    %12 = vector.shape_cast %11 : vector<4x1xf32> to vector<1x4x1xf32>
    %13 = vector.broadcast %12 : vector<1x4x1xf32> to vector<4x4x256xf32>
    %14 = arith.addf %10, %13 : vector<4x4x256xf32>
    %c0_6 = arith.constant 0 : index
    %c0_7 = arith.constant 0 : index
    %c0_8 = arith.constant 0 : index
    %15 = vector.load %arg4[%c0_6, %c0_7, %c0_8] : memref<4x4x256xf32, #tpu.memory_space<vmem>>, vector<4x4x256xf32>
    tpu.vector_store %arg4[%c0_6, %c0_7, %c0_8], %14 {strides = array<i32>} : memref<4x4x256xf32, #tpu.memory_space<vmem>>, vector<4x4x256xf32>,
    return
  }
  func.func @transform_0(%arg0: i32) -> (i32, i32, i32) {
    %c0_i32 = arith.constant 0 : i32
    %c0_i32_0 = arith.constant 0 : i32
    %c0_i32_1 = arith.constant 0 : i32
    %c0_i32_2 = arith.constant 0 : i32
    return %c0_i32, %c0_i32_0, %c0_i32_1 : i32, i32, i32
  }
  func.func @transform_1(%arg0: i32) -> (i32, i32) {
    %c0_i32 = arith.constant 0 : i32
    %c0_i32_0 = arith.constant 0 : i32
    %c0_i32_1 = arith.constant 0 : i32
    return %c0_i32, %c0_i32_0 : i32, i32
  }
  func.func @transform_2(%arg0: i32) -> (i32, i32) {
    %c0_i32 = arith.constant 0 : i32
    %c0_i32_0 = arith.constant 0 : i32
    %c0_i32_1 = arith.constant 0 : i32
    return %c0_i32, %c0_i32_0 : i32, i32
  }
  func.func @transform_3(%arg0: i32) -> (i32, i32, i32) {
    %c0_i32 = arith.constant 0 : i32
    %c0_i32_0 = arith.constant 0 : i32
    %c0_i32_1 = arith.constant 0 : i32
    return %arg0, %c0_i32, %c0_i32_0 : i32, i32, i32
  }
}

</mosaic_0001>

<llo_original>
// kernel: _bn_forward.1
$region0: #{_bn_forward.1}
  #allocation0 [shape = 'u32[]', space=smem, size = 0x4, offset = 0x4, fixed_abs, tag = 'smem constant byte address 0x4 - core index']
  #allocation1 [shape = 'u32[144,128]{1,0:T(1,128)}', space=vmem, size = 0x12000, scoped, tag = 'internal scratch']
  #allocation2 [shape = 'f32[4,1]{1,0:T(4,128)}', space=vmem, size = 0x800, scoped, tag = 'scratch operand']
  #allocation3 [shape = 'f32[4,1]{1,0:T(4,128)}', space=vmem, size = 0x800, scoped, tag = 'scratch operand']
  %s0 = inlined_call_operand.vmem [shape: f32[4,4,256], index: 0, kind: input, shape index: {}]
  %s1 = inlined_call_operand.vmem [shape: f32[4,1], index: 1, kind: input, shape index: {}]
  %s2 = inlined_call_operand.vmem [shape: f32[4,1], index: 2, kind: input, shape index: {}]
  %s3 = inlined_call_operand.vmem [shape: f32[4,4,256], index: 3, kind: output, shape index: {}]
  %s4 = sld [smem:[#allocation0]]
  $region26: #{_bn_forward.1} parent=0
    _
  %s6 = ssub.s32 1, %s4
  %s7 = scalar_select 0, %s6, %s4
  // Predicated region
  $region2: #{_bn_forward.1} parent=0 // pred_check
    _
  $region3: #{_bn_forward.1} parent=0 // pred_check_branch
    %9 = sbr.rel (0) target = $region5
  $region4: #{_bn_forward.1} parent=0 // pred_region
    _
  $region5: #{_bn_forward.1} parent=0 // pred_fallthru
    _
  // Predicated region
  $region6: #{_bn_forward.1} parent=0 // pred_check
    _
  $region7: #{_bn_forward.1} parent=0 // pred_check_branch
    %11 = sbr.rel (0) target = $region9
  $region8: #{_bn_forward.1} parent=0 // pred_region
    _
  $region9: #{_bn_forward.1} parent=0 // pred_fallthru
    _
  // Predicated region
  $region10: #{_bn_forward.1} parent=0 // pred_check
    _
  $region11: #{_bn_forward.1} parent=0 // pred_check_branch
    %13 = sbr.rel (0) target = $region13
  $region12: #{_bn_forward.1} parent=0 // pred_region
    _
  $region13: #{_bn_forward.1} parent=0 // pred_fallthru
    _
  %p14 = scmp.eq.s32.totalorder 0, 0
  // Predicated region
  $region14: #{_bn_forward.1} parent=0 // pred_check
    %p15 = pneg %p14
  $region15: #{_bn_forward.1} parent=0 // pred_check_branch
    %17 = sbr.rel (%p15) target = $region17
  $region16: #{_bn_forward.1} parent=0 // pred_region
    %s18 = smul.u32 0, 2
    %s19 = smul.addr %s18, 4
    %s20 = scalar_lea.vmem %s0, %s19
    %v21 = vld [vmem:[%s20] sm:$0xff]
    %v22 = vld [vmem:[%s20 + $0x8] sm:$0xff]
    %v23 = vld [vmem:[%s20 + $0x10] sm:$0xff]
    %v24 = vld [vmem:[%s20 + $0x18] sm:$0xff]
    %v29 = vcombine.high %v21, %v21
    %v30 = vcombine.high %v22, %v22
    %v31 = vcombine.high %v23, %v23
    %v32 = vcombine.high %v24, %v24
    %vm37 = vcmask 1043456
    %v38 = vsel %vm37, %v21, 0.0
    %v39 = vsel %vm37, %v22, 0.0
    %v40 = vadd.f32 %v38, %v39
    %v41 = vsel %vm37, %v23, 0.0
    %v42 = vadd.f32 %v40, %v41
    %v43 = vsel %vm37, %v24, 0.0
    %v44 = vadd.f32 %v42, %v43
    %v45 = vsel %vm37, %v29, 0.0
    %v46 = vsel %vm37, %v30, 0.0
    %v47 = vadd.f32 %v45, %v46
    %v48 = vsel %vm37, %v31, 0.0
    %v49 = vadd.f32 %v47, %v48
    %v50 = vsel %vm37, %v32, 0.0
    %v51 = vadd.f32 %v49, %v50
    %v52 = vsel %vm37, %v44, 0.0
    %v53 = vsel %vm37, %v51, 0.0
    %v54 = vadd.f32 %v52, %v53
    %55 = vadd.xlane.f32.xlu0 %v54
    %v56 = vpop.xlane.xlu0 %55
    %v57 = vadd.f32 %v56, 0.0
    %v58 = vmul.f32 %v57, 0.0009765625
    %v61 = vunpack.c.l.s4 839922192
    %v62 = vunpack.c.0.s8 %v61
    %v63 = vlaneseq
    %v64 = vshrl.u32 %v63, 7
    %v65 = vsub.s32 %v62, %v64
    %v66 = vrot.slane %v58, %v65
    %v68 = vsub.f32 %v21, %v66
    %v69 = vsub.f32 %v22, %v66
    %v70 = vsub.f32 %v23, %v66
    %v71 = vsub.f32 %v24, %v66
    %v72 = vmul.f32 %v68, %v68
    %v73 = vmul.f32 %v69, %v69
    %v74 = vmul.f32 %v70, %v70
    %v75 = vmul.f32 %v71, %v71
    %v80 = vcombine.high %v72, %v72
    %v81 = vcombine.high %v73, %v73
    %v82 = vcombine.high %v74, %v74
    %v83 = vcombine.high %v75, %v75
    %v88 = vsel %vm37, %v72, 0.0
    %v89 = vsel %vm37, %v73, 0.0
    %v90 = vadd.f32 %v88, %v89
    %v91 = vsel %vm37, %v74, 0.0
    %v92 = vadd.f32 %v90, %v91
    %v93 = vsel %vm37, %v75, 0.0
    %v94 = vadd.f32 %v92, %v93
    %v95 = vsel %vm37, %v80, 0.0
    %v96 = vsel %vm37, %v81, 0.0
    %v97 = vadd.f32 %v95, %v96
    %v98 = vsel %vm37, %v82, 0.0
    %v99 = vadd.f32 %v97, %v98
    %v100 = vsel %vm37, %v83, 0.0
    %v101 = vadd.f32 %v99, %v100
    %v102 = vsel %vm37, %v94, 0.0
    %v103 = vsel %vm37, %v101, 0.0
    %v104 = vadd.f32 %v102, %v103
    %105 = vadd.xlane.f32.xlu0 %v104
    %v106 = vpop.xlane.xlu0 %105
    %v107 = vadd.f32 %v106, 0.0
    %v108 = vmul.f32 %v107, 0.0009765625
    %v109 = vadd.f32 %v108, 1e-05
    %v110 = vrsqrt.pop %v109
    %v111 = vld [vmem:[%s1] sm:$0xf]
    %v112 = vmul.f32 %v111, %v110
    %vm113 = vcmask 3072
    %114 = vst.msk [vmem:[#allocation2] sm:$0xf] %vm113, %v112
    %v115 = vld [vmem:[%s2] sm:$0xf]
    %v116 = vmul.f32 %v58, %v112
    %v117 = vsub.f32 %v115, %v116
    %118 = vst.msk [vmem:[#allocation3] sm:$0xf] %vm113, %v117
  $region17: #{_bn_forward.1} parent=0 // pred_fallthru
    _
  %s119 = smul.u32 0, 4
  %s120 = smul.u32 %s119, 2
  %s121 = smul.addr %s120, 4
  %s122 = scalar_lea.vmem %s0, %s121
  %v123 = vld [vmem:[%s122] sm:$0xff]
  %v124 = vld [vmem:[%s122 + $0x8] sm:$0xff]
  %v125 = vld [vmem:[%s122 + $0x10] sm:$0xff]
  %v126 = vld [vmem:[%s122 + $0x18] sm:$0xff]
  %v127 = vld [vmem:[#allocation2] sm:$0xf]
  %129 = vset.pattern.permute.xlu0 0
  %130 = vperm.xlu0 %129, %v127
  %v131 = vpop.permute.xlu0 %130
  %v133 = vunpack.c.l.s4 839922192
  %v134 = vunpack.c.0.s8 %v133
  %v135 = vlaneseq
  %v136 = vshrl.u32 %v135, 7
  %v137 = vsub.s32 %v134, %v136
  %v138 = vrot.slane %v131, %v137
  %v140 = vmul.f32 %v123, %v138
  %v141 = vmul.f32 %v124, %v138
  %v142 = vmul.f32 %v125, %v138
  %v143 = vmul.f32 %v126, %v138
  %v144 = vld [vmem:[#allocation3] sm:$0xf]
  %146 = vset.pattern.permute.xlu0 0
  %147 = vperm.xlu0 %146, %v144
  %v148 = vpop.permute.xlu0 %147
  %v150 = vunpack.c.l.s4 839922192
  %v151 = vunpack.c.0.s8 %v150
  %v152 = vlaneseq
  %v153 = vshrl.u32 %v152, 7
  %v154 = vsub.s32 %v151, %v153
  %v155 = vrot.slane %v148, %v154
  %v157 = vadd.f32 %v140, %v155
  %v158 = vadd.f32 %v141, %v155
  %v159 = vadd.f32 %v142, %v155
  %v160 = vadd.f32 %v143, %v155
  %161 = vst [vmem:[%s3] sm:$0xff] %v157
  %162 = vst [vmem:[%s3 + $0x8] sm:$0xff] %v158
  %163 = vst [vmem:[%s3 + $0x10] sm:$0xff] %v159
  %164 = vst [vmem:[%s3 + $0x18] sm:$0xff] %v160
  // Predicated region
  $region18: #{_bn_forward.1} parent=0 // pred_check
    _
  $region19: #{_bn_forward.1} parent=0 // pred_check_branch
    %166 = sbr.rel (0) target = $region21
  $region20: #{_bn_forward.1} parent=0 // pred_region
    _
  $region21: #{_bn_forward.1} parent=0 // pred_fallthru
    _
  // Predicated region
  $region22: #{_bn_forward.1} parent=0 // pred_check
    _
  $region23: #{_bn_forward.1} parent=0 // pred_check_branch
    %168 = sbr.rel (0) target = $region25
  $region24: #{_bn_forward.1} parent=0 // pred_region
    _
  $region25: #{_bn_forward.1} parent=0 // pred_fallthru
    _

</llo_original>
